<compile_context>
chip_gen: v7x
topology: tpu7x:2x2x1
jax: 0.10.0
libtpu: 0.0.40
codegen_flags: <defaults>
</compile_context>

<pallas_src>
import math
import functools

import jax
import jax.numpy as jnp
from jax.experimental import pallas as pl
from jax.experimental.pallas import tpu as pltpu


# ----------------------------------------------------------------------------
# Parameter setup (mirrors PositionalEncoding.__init__)
# ----------------------------------------------------------------------------
def make_pe_table(d_model: int, max_len: int = 5000) -> jnp.ndarray:
    position = jnp.arange(0, max_len, dtype=jnp.float32)[:, None]           # (max_len, 1)
    div_term = jnp.exp(
        jnp.arange(0, d_model, 2, dtype=jnp.float32) * -(math.log(10000.0) / d_model)
    )                                                                        # (d_model/2,)
    pe = jnp.zeros((max_len, d_model), dtype=jnp.float32)
    pe = pe.at[:, 0::2].set(jnp.sin(position * div_term))
    pe = pe.at[:, 1::2].set(jnp.cos(position * div_term))
    return pe                                                                # (max_len, d_model)


# ----------------------------------------------------------------------------
# Tile-picking helpers (host-side, trace time)
# ----------------------------------------------------------------------------
def _pick_lane(n: int, cap: int = 1024) -> int:
    """Largest multiple-of-128 divisor of n that is <= cap; fallback: n (full dim)."""
    start = (min(cap, n) // 128) * 128
    for cand in range(start, 0, -128):
        if n % cand == 0:
            return cand
    return n


def _pick_rows(r: int, lane: int, itemsize: int, target_bytes: int = 512 * 1024) -> int:
    """Largest multiple-of-8 divisor of r with TR*lane*itemsize <= target; fallback r."""
    cap = max(1, target_bytes // (lane * itemsize))
    if r <= cap:
        return r
    start = (min(cap, r) // 8) * 8
    for cand in range(start, 0, -8):
        if r % cand == 0:
            return cand
    return r


def _pick_batch(b: int, row_bytes: int, target_bytes: int = 2 * 1024 * 1024) -> int:
    """Largest divisor of b with TB*row_bytes <= target; fallback 1."""
    cap = max(1, target_bytes // max(1, row_bytes))
    if b <= cap:
        return b
    for cand in range(min(cap, b), 0, -1):
        if b % cand == 0:
            return cand
    return 1


def _mix_u32(x):
    """Murmur3-style 32-bit finalizer (stateless hash -> uniform u32 bits)."""
    x = x ^ (x >> 16)
    x = x * jnp.uint32(0x7FEB352D)
    x = x ^ (x >> 15)
    x = x * jnp.uint32(0x846CA68B)
    x = x ^ (x >> 16)
    return x


# ----------------------------------------------------------------------------
# Kernels
# ----------------------------------------------------------------------------
def _add_pe_kernel(x_ref, pe_ref, o_ref):
    # x_ref/o_ref: (TB, TR, L); pe_ref: (TR, L) broadcast over the batch tile.
    o_ref[...] = (x_ref[...] + pe_ref[...]).astype(o_ref.dtype)


def _add_pe_dropout_kernel(seed_ref, x_ref, pe_ref, o_ref, *, p, tb, tr, lane, row_len):
    # Inverted dropout with a stateless hash RNG keyed on (seed, global elem index).
    r = pl.program_id(0)   # seq-row tile index (outer)
    b = pl.program_id(1)   # batch tile index (inner)

    y = x_ref[...] + pe_ref[...]                                             # (TB, TR, L)

    shape = y.shape
    bi = jax.lax.broadcasted_iota(jnp.int32, shape, 0).astype(jnp.uint32)
    ri = jax.lax.broadcasted_iota(jnp.int32, shape, 1).astype(jnp.uint32)
    li = jax.lax.broadcasted_iota(jnp.int32, shape, 2).astype(jnp.uint32)

    b0 = jnp.uint32(tb) * b.astype(jnp.uint32)
    r0 = jnp.uint32(tr) * r.astype(jnp.uint32)
    gidx = (b0 + bi) * jnp.uint32(row_len) + (r0 + ri) * jnp.uint32(lane) + li
    seed_u32 = seed_ref[0].astype(jnp.uint32)
    bits = _mix_u32(gidx ^ (seed_u32 * jnp.uint32(0x9E3779B9)))

    thresh = jnp.uint32(min(int(p * (2.0 ** 32)), 2 ** 32 - 1))              # P(drop) ~= p
    scale = jnp.float32(1.0 / (1.0 - p))
    keep = bits >= thresh
    o_ref[...] = jnp.where(keep, y.astype(jnp.float32) * scale,
                           jnp.float32(0.0)).astype(o_ref.dtype)


# ----------------------------------------------------------------------------
# Wrapper (forward pass)
# ----------------------------------------------------------------------------
def positional_encoding_forward(x, pe_table, *, dropout_p=0.0, training=False, seed=0):
    """x: (B, S, D).  Returns dropout(x + pe[:S]) with the same shape/dtype."""
    B, S, D = x.shape
    pe_slice = pe_table[:S, :].astype(x.dtype)                               # (S, D)

    N = S * D
    itemsize = jnp.dtype(x.dtype).itemsize

    # Reshape each batch row (length N) into a lane-dense (R, L) slab.
    L = _pick_lane(N)                     # multiple of 128 when possible
    R = N // L
    TR = _pick_rows(R, L, itemsize)       # multiple of 8 when possible
    TB = _pick_batch(B, TR * L * itemsize)

    x3 = x.reshape(B, R, L)
    pe3 = pe_slice.reshape(R, L)

    grid = (R // TR, B // TB)             # batch innermost -> PE tile stays resident
    x_spec = pl.BlockSpec((TB, TR, L), lambda r, b, *_: (b, r, 0))
    pe_spec = pl.BlockSpec((TR, L), lambda r, b, *_: (r, 0))
    o_spec = pl.BlockSpec((TB, TR, L), lambda r, b, *_: (b, r, 0))
    out_shape = jax.ShapeDtypeStruct((B, R, L), x.dtype)
    cparams = pltpu.CompilerParams(dimension_semantics=("parallel", "parallel"))

    if (not training) or dropout_p <= 0.0:
        out3 = pl.pallas_call(
            _add_pe_kernel,
            out_shape=out_shape,
            grid_spec=pltpu.PrefetchScalarGridSpec(
                num_scalar_prefetch=0,
                grid=grid,
                in_specs=[x_spec, pe_spec],
                out_specs=o_spec,
            ),
            compiler_params=cparams,
        )(x3, pe3)
        return out3.reshape(B, S, D)

    # Training path: PE add + inverted dropout, fused in one kernel.
    seed_arr = jnp.asarray([seed], dtype=jnp.int32)
    kernel = functools.partial(
        _add_pe_dropout_kernel, p=float(dropout_p), tb=TB, tr=TR, lane=L, row_len=N
    )
    out3 = pl.pallas_call(
        kernel,
        out_shape=out_shape,
        grid_spec=pltpu.PrefetchScalarGridSpec(
            num_scalar_prefetch=1,          # seed lands in SMEM
            grid=grid,
            in_specs=[x_spec, pe_spec],
            out_specs=o_spec,
        ),
        compiler_params=cparams,
    )(seed_arr, x3, pe3)
    return out3.reshape(B, S, D)


# ----------------------------------------------------------------------------
# Demo / self-test
# ----------------------------------------------------------------------------
if __name__ == "__main__":
    B, S, D = 2, 8, 32
    dropout_p = 0.1
    max_len = 64   # small max_len for the demo (module default is 5000)

    key = jax.random.PRNGKey(0)
    x = jax.random.normal(key, (B, S, D), dtype=jnp.float32)

    pe_table = make_pe_table(D, max_len=max_len)
    ref = x + pe_table[None, :S, :]

    # Eval-mode forward (dropout is identity) -- deterministic check vs JAX ref.
    out = positional_encoding_forward(x, pe_table, dropout_p=dropout_p, training=False)
    out = jax.block_until_ready(out)
    assert out.shape == (B, S, D)
    assert out.dtype == x.dtype
    assert jnp.allclose(out, ref, atol=1e-6), "eval-mode mismatch vs reference"

    # Training-mode forward: fused PE add + inverted dropout.
    out_train = positional_encoding_forward(
        x, pe_table, dropout_p=dropout_p, training=True, seed=1234
    )
    out_train = jax.block_until_ready(out_train)
    assert out_train.shape == (B, S, D)
    # Every surviving value must equal (x+pe)/(1-p); dropped values are 0.
    kept = out_train != 0.0
    assert jnp.allclose(
        jnp.where(kept, out_train, 0.0),
        jnp.where(kept, ref / (1.0 - dropout_p), 0.0),
        atol=1e-5,
    ), "dropout scaling mismatch"
    # Drop fraction should be in a loose band around p (very loose, non-flaky).
    drop_frac = 1.0 - float(jnp.mean(kept.astype(jnp.float32)))
    assert 0.0 < drop_frac < 0.5, f"implausible drop fraction {drop_frac}"

    print("KERNEL_OK")
</pallas_src>

<mosaic_0001>
module attributes {stable_mosaic.version = 11 : i64} {
  func.func @_add_pe_kernel(%arg0: i32, %arg1: i32, %arg2: memref<2x1x256xf32, #tpu.memory_space<vmem>>, %arg3: memref<1x256xf32, #tpu.memory_space<vmem>>, %arg4: memref<2x1x256xf32, #tpu.memory_space<vmem>>) attributes {dimension_semantics = [#tpu.dimension_semantics<parallel>, #tpu.dimension_semantics<parallel>], iteration_bounds = array<i64: 1, 1>, scalar_prefetch = 0 : i64, scratch_operands = 0 : i64, tpu.core_type = #tpu.core_type<tc>, window_params = [{transform_indices = @transform_0, window_bounds = array<i64: 2, 1, 256>}, {transform_indices = @transform_1, window_bounds = array<i64: 1, 256>}, {transform_indices = @transform_2, window_bounds = array<i64: 2, 1, 256>}]} {
    %c0 = arith.constant 0 : index
    %c0_0 = arith.constant 0 : index
    %c0_1 = arith.constant 0 : index
    %0 = vector.load %arg2[%c0, %c0_0, %c0_1] : memref<2x1x256xf32, #tpu.memory_space<vmem>>, vector<2x1x256xf32>
    %c0_2 = arith.constant 0 : index
    %c0_3 = arith.constant 0 : index
    %1 = vector.load %arg3[%c0_2, %c0_3] : memref<1x256xf32, #tpu.memory_space<vmem>>, vector<1x256xf32>
    %2 = vector.shape_cast %1 : vector<1x256xf32> to vector<1x1x256xf32>
    %3 = vector.broadcast %2 : vector<1x1x256xf32> to vector<2x1x256xf32>
    %4 = arith.addf %0, %3 : vector<2x1x256xf32>
    %c0_4 = arith.constant 0 : index
    %c0_5 = arith.constant 0 : index
    %c0_6 = arith.constant 0 : index
    %5 = vector.load %arg4[%c0_4, %c0_5, %c0_6] : memref<2x1x256xf32, #tpu.memory_space<vmem>>, vector<2x1x256xf32>
    tpu.vector_store %arg4[%c0_4, %c0_5, %c0_6], %4 {strides = array<i32>} : memref<2x1x256xf32, #tpu.memory_space<vmem>>, vector<2x1x256xf32>,
    return
  }
  func.func @transform_0(%arg0: i32, %arg1: i32) -> (i32, i32, i32) {
    %c0_i32 = arith.constant 0 : i32
    %c0_i32_0 = arith.constant 0 : i32
    return %arg1, %arg0, %c0_i32 : i32, i32, i32
  }
  func.func @transform_1(%arg0: i32, %arg1: i32) -> (i32, i32) {
    %c0_i32 = arith.constant 0 : i32
    %c0_i32_0 = arith.constant 0 : i32
    return %arg0, %c0_i32 : i32, i32
  }
  func.func @transform_2(%arg0: i32, %arg1: i32) -> (i32, i32, i32) {
    %c0_i32 = arith.constant 0 : i32
    %c0_i32_0 = arith.constant 0 : i32
    return %arg1, %arg0, %c0_i32 : i32, i32, i32
  }
}

</mosaic_0001>

<llo_original>
// kernel: tpu_custom_call.1
$region0: #{tpu_custom_call.1}
  #allocation0 [shape = 'u32[]', space=smem, size = 0x4, offset = 0x4, fixed_abs, tag = 'smem constant byte address 0x4 - core index']
  #allocation1 [shape = 'u32[144,128]{1,0:T(1,128)}', space=vmem, size = 0x12000, scoped, tag = 'internal scratch']
  %s0 = inlined_call_operand.hbm [shape: f32[2,1,256], index: 0, kind: input, shape index: {}]
  %s1 = inlined_call_operand.vmem [shape: f32[1,256], index: 1, kind: input, shape index: {}]
  %s2 = inlined_call_operand.hbm [shape: f32[2,1,256], index: 2, kind: output, shape index: {}]
  %s3 = sld [smem:[#allocation0]]
  $region22: #{tpu_custom_call.1} parent=0
    _
  %s5 = ssub.s32 1, %s3
  %s6 = scalar_select 0, %s5, %s3
  $region1: #{tpu_custom_call.1} parent=0
    #allocation2 [shape = 'u8[2048]{0}', space=vmem, size = 0x800, scoped, tag = 'input window, operand 0, single buffered']
    #allocation3 [shape = 's32[1]{0}', space=sflag, size = 0x4, scoped, tag = 'scoped memory for tpu_custom_call.1']
    #allocation4 [shape = 's32[1]{0}', space=sflag, size = 0x4, scoped, tag = 'scoped memory for tpu_custom_call.1']
    #allocation5 [shape = 'u8[2048]{0}', space=vmem, size = 0x800, scoped, tag = 'output window, operand 0, single buffered']
    %7 = vsyncpa [#allocation3], 0
    %8 = vsyncpa [#allocation4], 0
    // Predicated region
    $region2: #{tpu_custom_call.1} parent=1 // pred_check
      _
    $region3: #{tpu_custom_call.1} parent=1 // pred_check_branch
      %10 = sbr.rel (0) target = $region5
    $region4: #{tpu_custom_call.1} parent=1 // pred_region
      %s12 = ssub.s32 64, 64
      %13 = vsyncadd [#allocation3], %s12
      %s14 = sshll.u32 [#allocation2], 4
      %s15 = int_to_ptr.vmem [resolvable:$true] %s14
      %20 = dma.hbm_to_vmem [thread:$0]  %s0, 64, %s15, [#allocation3], 32, 32, 2
    $region5: #{tpu_custom_call.1} parent=1 // pred_fallthru
      _
    // Predicated region
    $region6: #{tpu_custom_call.1} parent=1 // pred_check
      _
    $region7: #{tpu_custom_call.1} parent=1 // pred_check_branch
      %22 = sbr.rel (0) target = $region9
    $region8: #{tpu_custom_call.1} parent=1 // pred_region
      _
    $region9: #{tpu_custom_call.1} parent=1 // pred_fallthru
      _
    // Predicated region
    $region10: #{tpu_custom_call.1} parent=1 // pred_check
      _
    $region11: #{tpu_custom_call.1} parent=1 // pred_check_branch
      %24 = sbr.rel (0) target = $region13
    $region12: #{tpu_custom_call.1} parent=1 // pred_region
      %25 = dma.done [#allocation3], 64
    $region13: #{tpu_custom_call.1} parent=1 // pred_fallthru
      _
    %v26 = vld [vmem:[#allocation2] sm:$0x3]
    %v27 = vld [vmem:[#allocation2 + $0x2] sm:$0x3]
    %v28 = vld [vmem:[%s1] sm:$0x3]
    %v29 = vadd.f32 %v26, %v28
    %v30 = vadd.f32 %v27, %v28
    %v31 = vlaneseq
    %vm32 = vcmp.ge.s32.totalorder %v31, 0
    %vm33 = vcmp.lt.s32.totalorder %v31, 256
    %vm34 = vmand %vm32, %vm33
    %35 = vst.msk [vmem:[#allocation5] sm:$0x3] %vm34, %v29
    %36 = vst.msk [vmem:[#allocation5 + $0x2] sm:$0x3] %vm34, %v30
    // Predicated region
    $region14: #{tpu_custom_call.1} parent=1 // pred_check
      _
    $region15: #{tpu_custom_call.1} parent=1 // pred_check_branch
      %38 = sbr.rel (0) target = $region17
    $region16: #{tpu_custom_call.1} parent=1 // pred_region
      %s40 = ssub.s32 64, 64
      %41 = vsyncadd [#allocation4], %s40
      %s42 = sshll.u32 [#allocation5], 4
      %s43 = int_to_ptr.vmem [resolvable:$true] %s42
      %48 = dma.vmem_to_hbm [thread:$0]  %s43, 64, %s2, [#allocation4], 32, 32, 2
    $region17: #{tpu_custom_call.1} parent=1 // pred_fallthru
      _
    // Predicated region
    $region18: #{tpu_custom_call.1} parent=1 // pred_check
      _
    $region19: #{tpu_custom_call.1} parent=1 // pred_check_branch
      %50 = sbr.rel (0) target = $region21
    $region20: #{tpu_custom_call.1} parent=1 // pred_region
      %51 = dma.done [#allocation4], 64
    $region21: #{tpu_custom_call.1} parent=1 // pred_fallthru
      _
    %52 = vsyncpa [#allocation3], 1
    %53 = vsyncpa [#allocation4], 1

</llo_original>
